<compile_context>
chip_gen: v7x
topology: tpu7x:2x2x1
jax: 0.10.0
libtpu: 0.0.40
codegen_flags: <defaults>
</compile_context>

<pallas_src>
import functools

import jax
import jax.numpy as jnp
import numpy as np
from jax import lax
from jax.experimental import pallas as pl
from jax.experimental.pallas import tpu as pltpu

_EPS2 = 1e-16  # (eps = 1e-8 clamp on each norm) ** 2, folded into the rsqrt


# ---------------------------------------------------------------------------
# Pass 1: cosine map + per-batch max over HW.
# ---------------------------------------------------------------------------
def _cos_kernel(pre_ref, cur_ref, cos_ref, maxc_ref, *, hw_valid, thw, padded):
    """pre_ref/cur_ref: (bt, Ck, thw); cos_ref: (bt, 1, thw);
    maxc_ref: (bt, 1, 1) f32, resident across the HW-tile (reduction) axis."""
    @pl.when(pl.program_id(1) == 0)
    def _init():
        maxc_ref[...] = jnp.full_like(maxc_ref, -jnp.inf)

    eps2 = jnp.float32(_EPS2)
    pre = pre_ref[...].astype(jnp.float32)                     # (bt, Ck, thw)
    cur = cur_ref[...].astype(jnp.float32)                     # (bt, Ck, thw)
    dot = jnp.sum(pre * cur, axis=1, keepdims=True)            # (bt, 1, thw)
    ssp = jnp.sum(pre * pre, axis=1, keepdims=True)
    ssc = jnp.sum(cur * cur, axis=1, keepdims=True)
    cos = (dot * lax.rsqrt(jnp.maximum(ssp, eps2))
               * lax.rsqrt(jnp.maximum(ssc, eps2)))            # (bt, 1, thw)

    cos_store = cos.astype(cos_ref.dtype)
    cos_ref[...] = cos_store

    # Max over valid HW columns only (pad lanes masked to -inf).
    cos_f32 = cos_store.astype(jnp.float32)
    if padded:
        lane = lax.broadcasted_iota(jnp.int32, cos_f32.shape, 2)
        col = pl.program_id(1) * thw + lane
        cos_f32 = jnp.where(col < hw_valid, cos_f32, -jnp.inf)
    tile_max = jnp.max(cos_f32, axis=2, keepdims=True)         # (bt, 1, 1)
    maxc_ref[...] = jnp.maximum(maxc_ref[...], tile_max)


# ---------------------------------------------------------------------------
# Pass 2: similarity-weighted blend + fused 1x1 conv on one HW tile.
# ---------------------------------------------------------------------------
def _blend_kernel(cur_ref, hid_ref, cos_ref, maxc_ref, w_ref, b_ref, out_ref):
    """cur_ref: (bt, Ck, thw); hid_ref: (bt, Ch, thw); cos_ref: (bt, 1, thw);
    maxc_ref: (bt, 1, 1) f32; w_ref: (Co, Ch+Ck) (first Ch cols act on
    hidden*sim); b_ref: (Co, 1); out_ref: (bt, Co, thw)."""
    bt, co, thw = out_ref.shape
    w = w_ref[...]                                    # native dtype -> MXU rate

    # exp(cos)/max(exp(cos)) == exp(cos - max(cos)); max precomputed in pass 1.
    cos = cos_ref[...].astype(jnp.float32)                     # (bt, 1, thw)
    sim = jnp.exp(cos - maxc_ref[...])                         # (bt, 1, thw)

    hid = hid_ref[...].astype(jnp.float32)                     # (bt, Ch, thw)
    cur = cur_ref[...].astype(jnp.float32)                     # (bt, Ck, thw)
    # Build the fused conv operand in f32 and cast once (avoids bf16
    # sublane-repack on the concat).
    feat = jnp.concatenate([hid * sim, cur * (1.0 - sim)], axis=1)
    feat = feat.astype(w.dtype)                                # (bt, Ch+Ck, thw)

    # Bias broadcast hoisted out of the (tiny) batch loop.
    bias = jnp.broadcast_to(b_ref[...].astype(jnp.float32), (co, thw))

    # bt == 1 in the main regime (only small spatial tiles pack batches), so
    # this loop is normally a single wide-N MXU call.
    for bb in range(bt):
        out = jnp.dot(w, feat[bb], preferred_element_type=jnp.float32) + bias
        out_ref[bb] = out.astype(out_ref.dtype)


# ---------------------------------------------------------------------------
# Host-side helpers.
# ---------------------------------------------------------------------------
def _round_up(x, m):
    return (x + m - 1) // m * m


def _choose_spatial_tile(hw_padded, max_tile):
    """Largest multiple-of-128 divisor of hw_padded that is <= max_tile
    (hw_padded itself if it already fits).  hw_padded is a multiple of 128."""
    if hw_padded <= max_tile:
        return hw_padded
    t = (max_tile // 128) * 128
    while t >= 128:
        if hw_padded % t == 0:
            return t
        t -= 128
    return 128


def _vmem_capacity_bytes():
    try:
        cap = int(getattr(pltpu.get_tpu_info(), "vmem_capacity_bytes", 0))
        if cap > 0:
            return cap
    except Exception:
        pass
    return 64 * 1024 * 1024  # conservative fallback (v7x physical VMEM)


def _pass2_bytes(bt, thw, ck, ch, co, in_item, cos_item, out_item, w_item):
    """Pass-2 VMEM footprint: double-buffered streamed blocks + f32 working set
    + resident weight/bias blocks."""
    streamed = 2 * bt * thw * ((ck + ch) * in_item + cos_item + co * out_item)
    work = bt * thw * (ck + ch + 1 + (ck + ch) + co) * 4
    const = 2 * (co * (ck + ch) + co) * w_item
    return streamed + work + const


def template_matching_pallas(pre_key, cur_key, hidden, w, b, *, max_tile=2048):
    """pre_key, cur_key: (B, Ck, H, W); hidden: (B, Ch, H, W);
    w: (Co, Ch+Ck) 1x1-conv weight (PyTorch (Co,Ci,1,1) squeezed), first Ch
    columns act on hidden*sim; b: (Co,).  Returns (B, Co, H, W)."""
    B, Ck, H, W = pre_key.shape
    Ch = hidden.shape[1]
    Co = w.shape[0]
    HW = H * W
    out_dtype = jnp.result_type(cur_key.dtype, w.dtype)
    in_dtype = pre_key.dtype
    cos_dtype = (jnp.float32 if jnp.dtype(in_dtype) == jnp.dtype(jnp.float32)
                 else jnp.dtype(in_dtype))

    # Host layout: NCHW -> (B, C, HW) so HW sits on lanes, channels on sublanes.
    pre = pre_key.reshape(B, Ck, HW)
    cur = cur_key.reshape(B, Ck, HW)
    hid = hidden.reshape(B, Ch, HW)
    b2 = b.reshape(Co, 1)

    # Ragged HW: pad to a multiple of 128 so spatial tiling always applies
    # (pad lanes masked out of the pass-1 max, sliced off the output).
    HWp = _round_up(HW, 128)
    padded = HWp != HW
    if padded:
        pad = ((0, 0), (0, 0), (0, HWp - HW))
        pre = jnp.pad(pre, pad)
        cur = jnp.pad(cur, pad)
        hid = jnp.pad(hid, pad)

    # --- tile sizing against the real VMEM capacity (v7x has only 64 MiB). ---
    vmem_cap = _vmem_capacity_bytes()
    budget = vmem_cap // 4
    in_item = jnp.dtype(in_dtype).itemsize
    cos_item = jnp.dtype(cos_dtype).itemsize
    out_item = jnp.dtype(out_dtype).itemsize
    w_item = jnp.dtype(w.dtype).itemsize

    thw = _choose_spatial_tile(HWp, max_tile)
    while thw > 128 and _pass2_bytes(1, thw, Ck, Ch, Co, in_item, cos_item,
                                     out_item, w_item) > budget:
        thw = _choose_spatial_tile(HWp, thw - 128)

    # Pack batches only when the spatial tile is genuinely small; keep at
    # least 2 batch-grid rows so dual-core parts (v7x) get parallel work.
    if thw >= 512 or B == 1:
        bt = 1
    else:
        bt = max(1, B // 2)
        while bt > 1 and (B % bt or
                          _pass2_bytes(bt, thw, Ck, Ch, Co, in_item, cos_item,
                                       out_item, w_item) > budget):
            bt -= 1

    n_bt = B // bt
    n_tt = HWp // thw
    foot = _pass2_bytes(bt, thw, Ck, Ch, Co, in_item, cos_item, out_item,
                        w_item)
    vmem_limit = int(min(max(4 * foot, 32 * 1024 * 1024), vmem_cap * 3 // 4))

    # ---- Pass 1: cosine map + per-batch max (reads only pre/cur). ----------
    cos_map, maxc = pl.pallas_call(
        functools.partial(_cos_kernel, hw_valid=HW, thw=thw, padded=padded),
        out_shape=(jax.ShapeDtypeStruct((B, 1, HWp), cos_dtype),
                   jax.ShapeDtypeStruct((B, 1, 1), jnp.float32)),
        grid_spec=pltpu.PrefetchScalarGridSpec(
            num_scalar_prefetch=0,
            grid=(n_bt, n_tt),
            in_specs=[
                pl.BlockSpec((bt, Ck, thw), lambda bi, ti: (bi, 0, ti)),
                pl.BlockSpec((bt, Ck, thw), lambda bi, ti: (bi, 0, ti)),
            ],
            out_specs=[
                pl.BlockSpec((bt, 1, thw), lambda bi, ti: (bi, 0, ti)),
                pl.BlockSpec((bt, 1, 1), lambda bi, ti: (bi, 0, 0)),
            ],
        ),
        compiler_params=pltpu.CompilerParams(
            dimension_semantics=("parallel", "arbitrary"),
            vmem_limit_bytes=vmem_limit),
    )(pre, cur)

    # ---- Pass 2: blend + fused 1x1 conv; every tile independent. -----------
    out = pl.pallas_call(
        _blend_kernel,
        out_shape=jax.ShapeDtypeStruct((B, Co, HWp), out_dtype),
        grid_spec=pltpu.PrefetchScalarGridSpec(
            num_scalar_prefetch=0,
            grid=(n_bt, n_tt),
            in_specs=[
                pl.BlockSpec((bt, Ck, thw), lambda bi, ti: (bi, 0, ti)),  # cur
                pl.BlockSpec((bt, Ch, thw), lambda bi, ti: (bi, 0, ti)),  # hid
                pl.BlockSpec((bt, 1, thw), lambda bi, ti: (bi, 0, ti)),   # cos
                pl.BlockSpec((bt, 1, 1), lambda bi, ti: (bi, 0, 0)),      # max
                pl.BlockSpec((Co, Ch + Ck), lambda bi, ti: (0, 0)),       # w
                pl.BlockSpec((Co, 1), lambda bi, ti: (0, 0)),             # bias
            ],
            out_specs=pl.BlockSpec((bt, Co, thw), lambda bi, ti: (bi, 0, ti)),
        ),
        compiler_params=pltpu.CompilerParams(
            dimension_semantics=("parallel", "parallel"),
            vmem_limit_bytes=vmem_limit),
    )(cur, hid, cos_map, maxc, w, b2)

    if padded:
        out = out[:, :, :HW]
    return out.reshape(B, Co, H, W)


# ---------------------------------------------------------------------------
# Pure-JAX (f32) reference mirroring the PyTorch forward.
# ---------------------------------------------------------------------------
def template_matching_ref(pre_key, cur_key, hidden, w, b):
    B, Ck, H, W = pre_key.shape
    pre = pre_key.reshape(B, Ck, -1).astype(jnp.float32)
    cur = cur_key.reshape(B, Ck, -1).astype(jnp.float32)
    dot = jnp.sum(pre * cur, axis=1)
    n1 = jnp.maximum(jnp.sqrt(jnp.sum(pre * pre, axis=1)), 1e-8)
    n2 = jnp.maximum(jnp.sqrt(jnp.sum(cur * cur, axis=1)), 1e-8)
    sim = jnp.exp(dot / (n1 * n2))
    sim = sim / jnp.max(sim, axis=-1, keepdims=True)
    sim = sim.reshape(B, 1, H, W)
    out = cur_key.astype(jnp.float32) * (1.0 - sim)
    feat = jnp.concatenate([hidden.astype(jnp.float32) * sim, out], axis=1)
    y = jnp.einsum("oc,bchw->bohw", w.astype(jnp.float32), feat,
                   precision=jax.lax.Precision.HIGHEST)
    return y + b.astype(jnp.float32).reshape(1, -1, 1, 1)


if __name__ == "__main__":
    # Small shapes consistent with the module: C_key + C_hidden = ch_in.
    B, Ck, Ch, H, W = 2, 8, 8, 16, 16
    ch_in, ch_out = Ck + Ch, 8

    key = jax.random.PRNGKey(0)
    k1, k2, k3, k4, k5 = jax.random.split(key, 5)
    pre_key = jax.random.normal(k1, (B, Ck, H, W), dtype=jnp.float32)
    cur_key = jax.random.normal(k2, (B, Ck, H, W), dtype=jnp.float32)
    hidden = jax.random.normal(k3, (B, Ch, H, W), dtype=jnp.float32)
    # 1x1-conv parameters (PyTorch weight (Co, Ci, 1, 1) squeezed to (Co, Ci)).
    w_blend = jax.random.normal(k4, (ch_out, ch_in), dtype=jnp.float32) * 0.1
    b_blend = jax.random.normal(k5, (ch_out,), dtype=jnp.float32) * 0.1

    # float32 path (tight check).
    out = jax.block_until_ready(
        template_matching_pallas(pre_key, cur_key, hidden, w_blend, b_blend))
    ref = template_matching_ref(pre_key, cur_key, hidden, w_blend, b_blend)
    np.testing.assert_allclose(np.asarray(out), np.asarray(ref),
                               rtol=1e-4, atol=1e-4)

    # bf16 path (native-dtype streaming; f32 math inside the kernel).
    bf = lambda x: x.astype(jnp.bfloat16)
    out_bf = jax.block_until_ready(
        template_matching_pallas(bf(pre_key), bf(cur_key), bf(hidden),
                                 bf(w_blend), bf(b_blend)))
    assert out_bf.dtype == jnp.bfloat16
    ref_bf = template_matching_ref(bf(pre_key), bf(cur_key), bf(hidden),
                                   bf(w_blend), bf(b_blend))
    np.testing.assert_allclose(np.asarray(out_bf.astype(jnp.float32)),
                               np.asarray(ref_bf), rtol=3e-2, atol=3e-2)

    # Ragged-HW path (HW not a multiple of 128): exercises host padding +
    # in-kernel pad masking of the max reduction.
    Hr, Wr = 10, 10
    pre_r = jax.random.normal(k1, (B, Ck, Hr, Wr), dtype=jnp.float32)
    cur_r = jax.random.normal(k2, (B, Ck, Hr, Wr), dtype=jnp.float32)
    hid_r = jax.random.normal(k3, (B, Ch, Hr, Wr), dtype=jnp.float32)
    out_r = jax.block_until_ready(
        template_matching_pallas(pre_r, cur_r, hid_r, w_blend, b_blend))
    ref_r = template_matching_ref(pre_r, cur_r, hid_r, w_blend, b_blend)
    np.testing.assert_allclose(np.asarray(out_r), np.asarray(ref_r),
                               rtol=1e-4, atol=1e-4)

    print("KERNEL_OK")
</pallas_src>

<mosaic_0001>
module attributes {stable_mosaic.version = 11 : i64} {
  func.func @_cos_kernel(%arg0: i32, %arg1: i32, %arg2: memref<1x8x256xf32, #tpu.memory_space<vmem>>, %arg3: memref<1x8x256xf32, #tpu.memory_space<vmem>>, %arg4: memref<1x1x256xf32, #tpu.memory_space<vmem>>, %arg5: memref<1x1x1xf32, #tpu.memory_space<vmem>>) attributes {dimension_semantics = [#tpu.dimension_semantics<parallel>, #tpu.dimension_semantics<arbitrary>], iteration_bounds = array<i64: 2, 1>, scalar_prefetch = 0 : i64, scratch_operands = 0 : i64, tpu.core_type = #tpu.core_type<tc>, window_params = [{transform_indices = @transform_0, window_bounds = array<i64: 1, 8, 256>}, {transform_indices = @transform_1, window_bounds = array<i64: 1, 8, 256>}, {transform_indices = @transform_2, window_bounds = array<i64: 1, 1, 256>}, {transform_indices = @transform_3, window_bounds = array<i64: 1, 1, 1>}]} {
    %c0_i32 = arith.constant 0 : i32
    %0 = arith.cmpi eq, %arg1, %c0_i32 : i32
    %1 = arith.extui %0 : i1 to i32
    %c0_i32_0 = arith.constant 0 : i32
    %2 = arith.cmpi ne, %1, %c0_i32_0 : i32
    scf.if %2 {
      %cst_20 = arith.constant 0xFF800000 : f32
      %28 = vector.broadcast %cst_20 : f32 to vector<1x1x1xf32>
      %c0_21 = arith.constant 0 : index
      %c0_22 = arith.constant 0 : index
      %c0_23 = arith.constant 0 : index
      %29 = vector.load %arg5[%c0_21, %c0_22, %c0_23] : memref<1x1x1xf32, #tpu.memory_space<vmem>>, vector<1x1x1xf32>
      tpu.vector_store %arg5[%c0_21, %c0_22, %c0_23], %28 {strides = array<i32>} : memref<1x1x1xf32, #tpu.memory_space<vmem>>, vector<1x1x1xf32>,
    } else {
    }
    %c0 = arith.constant 0 : index
    %c0_1 = arith.constant 0 : index
    %c0_2 = arith.constant 0 : index
    %3 = vector.load %arg2[%c0, %c0_1, %c0_2] : memref<1x8x256xf32, #tpu.memory_space<vmem>>, vector<1x8x256xf32>
    %c0_3 = arith.constant 0 : index
    %c0_4 = arith.constant 0 : index
    %c0_5 = arith.constant 0 : index
    %4 = vector.load %arg3[%c0_3, %c0_4, %c0_5] : memref<1x8x256xf32, #tpu.memory_space<vmem>>, vector<1x8x256xf32>
    %5 = arith.mulf %3, %4 : vector<1x8x256xf32>
    %cst = arith.constant dense<0.000000e+00> : vector<1x256xf32>
    %6 = vector.multi_reduction <add>, %5, %cst [1] : vector<1x8x256xf32> to vector<1x256xf32>
    %7 = vector.shape_cast %6 : vector<1x256xf32> to vector<1x1x256xf32>
    %8 = arith.mulf %3, %3 : vector<1x8x256xf32>
    %cst_6 = arith.constant dense<0.000000e+00> : vector<1x256xf32>
    %9 = vector.multi_reduction <add>, %8, %cst_6 [1] : vector<1x8x256xf32> to vector<1x256xf32>
    %10 = vector.shape_cast %9 : vector<1x256xf32> to vector<1x1x256xf32>
    %11 = arith.mulf %4, %4 : vector<1x8x256xf32>
    %cst_7 = arith.constant dense<0.000000e+00> : vector<1x256xf32>
    %12 = vector.multi_reduction <add>, %11, %cst_7 [1] : vector<1x8x256xf32> to vector<1x256xf32>
    %13 = vector.shape_cast %12 : vector<1x256xf32> to vector<1x1x256xf32>
    %cst_8 = arith.constant 1.000000e-16 : f32
    %14 = vector.broadcast %cst_8 : f32 to vector<1x1x256xf32>
    %15 = arith.maximumf %10, %14 : vector<1x1x256xf32>
    %16 = math.rsqrt %15 : vector<1x1x256xf32>
    %17 = arith.mulf %7, %16 : vector<1x1x256xf32>
    %cst_9 = arith.constant 1.000000e-16 : f32
    %18 = vector.broadcast %cst_9 : f32 to vector<1x1x256xf32>
    %19 = arith.maximumf %13, %18 : vector<1x1x256xf32>
    %20 = math.rsqrt %19 : vector<1x1x256xf32>
    %21 = arith.mulf %17, %20 : vector<1x1x256xf32>
    %c0_10 = arith.constant 0 : index
    %c0_11 = arith.constant 0 : index
    %c0_12 = arith.constant 0 : index
    %22 = vector.load %arg4[%c0_10, %c0_11, %c0_12] : memref<1x1x256xf32, #tpu.memory_space<vmem>>, vector<1x1x256xf32>
    tpu.vector_store %arg4[%c0_10, %c0_11, %c0_12], %21 {strides = array<i32>} : memref<1x1x256xf32, #tpu.memory_space<vmem>>, vector<1x1x256xf32>,
    %cst_13 = arith.constant dense<0xFF800000> : vector<1x1xf32>
    %23 = vector.multi_reduction <maximumf>, %21, %cst_13 [2] : vector<1x1x256xf32> to vector<1x1xf32>
    %24 = vector.shape_cast %23 : vector<1x1xf32> to vector<1x1x1xf32>
    %c0_14 = arith.constant 0 : index
    %c0_15 = arith.constant 0 : index
    %c0_16 = arith.constant 0 : index
    %25 = vector.load %arg5[%c0_14, %c0_15, %c0_16] : memref<1x1x1xf32, #tpu.memory_space<vmem>>, vector<1x1x1xf32>
    %26 = arith.maximumf %25, %24 : vector<1x1x1xf32>
    %c0_17 = arith.constant 0 : index
    %c0_18 = arith.constant 0 : index
    %c0_19 = arith.constant 0 : index
    %27 = vector.load %arg5[%c0_17, %c0_18, %c0_19] : memref<1x1x1xf32, #tpu.memory_space<vmem>>, vector<1x1x1xf32>
    tpu.vector_store %arg5[%c0_17, %c0_18, %c0_19], %26 {strides = array<i32>} : memref<1x1x1xf32, #tpu.memory_space<vmem>>, vector<1x1x1xf32>,
    return
  }
  func.func @transform_0(%arg0: i32, %arg1: i32) -> (i32, i32, i32) {
    %c0_i32 = arith.constant 0 : i32
    %c0_i32_0 = arith.constant 0 : i32
    return %arg0, %c0_i32, %arg1 : i32, i32, i32
  }
  func.func @transform_1(%arg0: i32, %arg1: i32) -> (i32, i32, i32) {
    %c0_i32 = arith.constant 0 : i32
    %c0_i32_0 = arith.constant 0 : i32
    return %arg0, %c0_i32, %arg1 : i32, i32, i32
  }
  func.func @transform_2(%arg0: i32, %arg1: i32) -> (i32, i32, i32) {
    %c0_i32 = arith.constant 0 : i32
    %c0_i32_0 = arith.constant 0 : i32
    return %arg0, %c0_i32, %arg1 : i32, i32, i32
  }
  func.func @transform_3(%arg0: i32, %arg1: i32) -> (i32, i32, i32) {
    %c0_i32 = arith.constant 0 : i32
    %c0_i32_0 = arith.constant 0 : i32
    %c0_i32_1 = arith.constant 0 : i32
    return %arg0, %c0_i32, %c0_i32_0 : i32, i32, i32
  }
}

</mosaic_0001>

<llo_original>
// kernel: tpu_custom_call.1
$region0: #{tpu_custom_call.1}
  #allocation0 [shape = 'u32[]', space=smem, size = 0x4, offset = 0x4, fixed_abs, tag = 'smem constant byte address 0x4 - core index']
  #allocation1 [shape = 'u32[144,128]{1,0:T(1,128)}', space=vmem, size = 0x12000, scoped, tag = 'internal scratch']
  %s0 = inlined_call_operand.hbm [shape: f32[2,8,256], index: 0, kind: input, shape index: {}]
  %s1 = inlined_call_operand.hbm [shape: f32[2,8,256], index: 1, kind: input, shape index: {}]
  %s2 = inlined_call_operand.hbm [shape: f32[2,1,256], index: 2, kind: output, shape index: {0}]
  %s3 = inlined_call_operand.vmem [shape: f32[2,1,1], index: 3, kind: output, shape index: {1}]
  %4 = xla_tuple %s2, %s3
  %s5 = sld [smem:[#allocation0]]
  $region61: #{tpu_custom_call.1} parent=0
    _
  %s7 = ssub.s32 1, %s5
  %s8 = scalar_select 0, %s7, %s5
  $region1: #{tpu_custom_call.1} parent=0
    #allocation2 [shape = 'u8[16384]{0}', space=vmem, size = 0x4000, scoped, tag = 'input window, operand 0']
    #allocation3 [shape = 's32[2]{0}', space=sflag, size = 0x8, scoped, tag = 'scoped memory for tpu_custom_call.1']
    #allocation4 [shape = 's32[2]{0}', space=sflag, size = 0x8, scoped, tag = 'scoped memory for tpu_custom_call.1']
    #allocation5 [shape = 'u8[16384]{0}', space=vmem, size = 0x4000, scoped, tag = 'input window, operand 1']
    #allocation6 [shape = 's32[2]{0}', space=sflag, size = 0x8, scoped, tag = 'scoped memory for tpu_custom_call.1']
    #allocation7 [shape = 'u8[2048]{0}', space=vmem, size = 0x800, scoped, tag = 'output window, operand 0']
    %9 = vsyncpa [#allocation3], 0
    %s10 = scalar_lea.sflag [#allocation3], 1
    %11 = vsyncpa %s10, 0
    %12 = vsyncpa [#allocation6], 0
    %s13 = scalar_lea.sflag [#allocation6], 1
    %14 = vsyncpa %s13, 0
    %15 = vsyncpa [#allocation4], 0
    %s16 = scalar_lea.sflag [#allocation4], 1
    %17 = vsyncpa %s16, 0
    loop: start=0, step=1, limit=4
    $region2: #{tpu_custom_call.1} parent=1 // loop_pre_header
      _
    $region3: #{tpu_custom_call.1} parent=1 // loop_header
      %s19 = sphi 0, %s23
      %p20 = scmp.ge.s32.totalorder %s19, 4
      %s26 = sphi 0, %s38
      %s27 = sphi 0, %s34
      %s28 = sphi 0, %s26
      %s29 = sphi 0, %s27
      %s30 = sphi 0, %s28
      %s31 = sphi 0, %s29
      %s43 = sphi 0, %s45
      %s46 = sphi 0, %s43
      %s47 = sphi 0, %s46
      %s63 = sphi 0, %s47
      %s71 = sphi 0, %s73
      %s74 = sphi 0, %s71
      %s75 = sphi 0, %s74
      %s91 = sphi 0, %s75
      %s99 = sphi 0, %s101
      %s102 = sphi 0, %s99
      %s103 = sphi 0, %s102
      %s119 = sphi 0, %s103
      %s125 = sphi 0, %s127
      %s128 = sphi 0, %s125
      %s129 = sphi 0, %s128
      %s145 = sphi 0, %s129
    $region4: #{tpu_custom_call.1} parent=1 // loop_header_branch
      %22 = sbr.rel (%p20) target = $region8
    $region5: #{tpu_custom_call.1} parent=1 // loop_body
      %s24 = ssub.s32 %s19, 1
      %s25 = ssub.s32 %s19, 2
      %s32 = sadd.s32 1, %s27
      %p33 = scmp.ge.s32.totalorder %s32, 1
      %s34 = scalar_select %p33, 0, %s32
      %s35 = sadd.s32 1, %s26
      %s36 = scalar_select %p33, %s35, %s26
      %p37 = scmp.ge.s32.totalorder %s36, 2
      %s38 = scalar_select %p37, 0, %s36
      %s39 = ssub.s32 %s26, %s38
      %s40 = ssub.s32 %s27, %s34
      %s41 = sor.u32 %s39, %s40
      %p42 = scmp.eq.s32.totalorder %s41, 0
      %s44 = sadd.s32 %s43, 1
      %s45 = scalar_select %p42, %s43, %s44
      %p48 = pneg %p42
      %p49 = scmp.eq.s32.totalorder %s19, 1
      %p50 = por %p48, %p49
      %p51 = scmp.ne.s32.totalorder %s43, %s46
      %p52 = scmp.eq.s32.totalorder %s19, 0
      %p53 = por %p51, %p52
      %p54 = scmp.ne.s32.totalorder %s43, %s46
      %p55 = scmp.eq.s32.totalorder %s24, 1
      %p56 = por %p54, %p55
      %p57 = scmp.ne.s32.totalorder %s46, %s47
      %p58 = scmp.eq.s32.totalorder %s24, 0
      %p59 = por %p57, %p58
      %p60 = scmp.ne.s32.totalorder %s46, %s47
      %p61 = scmp.eq.s32.totalorder %s25, 1
      %p62 = por %p60, %p61
      %p64 = scmp.ne.s32.totalorder %s47, %s63
      %p65 = scmp.eq.s32.totalorder %s25, 0
      %p66 = por %p64, %p65
      %s67 = ssub.s32 %s26, %s38
      %s68 = ssub.s32 %s27, %s34
      %s69 = sor.u32 %s67, %s68
      %p70 = scmp.eq.s32.totalorder %s69, 0
      %s72 = sadd.s32 %s71, 1
      %s73 = scalar_select %p70, %s71, %s72
      %p76 = pneg %p70
      %p77 = scmp.eq.s32.totalorder %s19, 1
      %p78 = por %p76, %p77
      %p79 = scmp.ne.s32.totalorder %s71, %s74
      %p80 = scmp.eq.s32.totalorder %s19, 0
      %p81 = por %p79, %p80
      %p82 = scmp.ne.s32.totalorder %s71, %s74
      %p83 = scmp.eq.s32.totalorder %s24, 1
      %p84 = por %p82, %p83
      %p85 = scmp.ne.s32.totalorder %s74, %s75
      %p86 = scmp.eq.s32.totalorder %s24, 0
      %p87 = por %p85, %p86
      %p88 = scmp.ne.s32.totalorder %s74, %s75
      %p89 = scmp.eq.s32.totalorder %s25, 1
      %p90 = por %p88, %p89
      %p92 = scmp.ne.s32.totalorder %s75, %s91
      %p93 = scmp.eq.s32.totalorder %s25, 0
      %p94 = por %p92, %p93
      %s95 = ssub.s32 %s26, %s38
      %s96 = ssub.s32 %s27, %s34
      %s97 = sor.u32 %s95, %s96
      %p98 = scmp.eq.s32.totalorder %s97, 0
      %s100 = sadd.s32 %s99, 1
      %s101 = scalar_select %p98, %s99, %s100
      %p104 = pneg %p98
      %p105 = scmp.eq.s32.totalorder %s19, 1
      %p106 = por %p104, %p105
      %p107 = scmp.ne.s32.totalorder %s99, %s102
      %p108 = scmp.eq.s32.totalorder %s19, 0
      %p109 = por %p107, %p108
      %p110 = scmp.ne.s32.totalorder %s99, %s102
      %p111 = scmp.eq.s32.totalorder %s24, 1
      %p112 = por %p110, %p111
      %p113 = scmp.ne.s32.totalorder %s102, %s103
      %p114 = scmp.eq.s32.totalorder %s24, 0
      %p115 = por %p113, %p114
      %p116 = scmp.ne.s32.totalorder %s102, %s103
      %p117 = scmp.eq.s32.totalorder %s25, 1
      %p118 = por %p116, %p117
      %p120 = scmp.ne.s32.totalorder %s103, %s119
      %p121 = scmp.eq.s32.totalorder %s25, 0
      %p122 = por %p120, %p121
      %s123 = ssub.s32 %s26, %s38
      %p124 = scmp.eq.s32.totalorder %s123, 0
      %s126 = sadd.s32 %s125, 1
      %s127 = scalar_select %p124, %s125, %s126
      %p130 = pneg %p124
      %p131 = scmp.eq.s32.totalorder %s19, 1
      %p132 = por %p130, %p131
      %p133 = scmp.ne.s32.totalorder %s125, %s128
      %p134 = scmp.eq.s32.totalorder %s19, 0
      %p135 = por %p133, %p134
      %p136 = scmp.ne.s32.totalorder %s125, %s128
      %p137 = scmp.eq.s32.totalorder %s24, 1
      %p138 = por %p136, %p137
      %p139 = scmp.ne.s32.totalorder %s128, %s129
      %p140 = scmp.eq.s32.totalorder %s24, 0
      %p141 = por %p139, %p140
      %p142 = scmp.ne.s32.totalorder %s128, %s129
      %p143 = scmp.eq.s32.totalorder %s25, 1
      %p144 = por %p142, %p143
      %p146 = scmp.ne.s32.totalorder %s129, %s145
      %p147 = scmp.eq.s32.totalorder %s25, 0
      %p148 = por %p146, %p147
      %p149 = scmp.le.s32.totalorder 1, %s19
      %p150 = scmp.lt.s32.totalorder %s19, 3
      %p151 = pnand %p149, %p150
      %p152 = pneg %p151
      // Predicated region
      $region9: #{tpu_custom_call.1} parent=5 // pred_check
        _
      $region10: #{tpu_custom_call.1} parent=5 // pred_check_branch
        %154 = sbr.rel (%p151) target = $region12
      $region11: #{tpu_custom_call.1} parent=5 // pred_region
        %s155 = ssub.s32 %s19, 1
      $region12: #{tpu_custom_call.1} parent=5 // pred_fallthru
        _
      %p156 = scmp.lt.s32.totalorder %s19, 2
      // Predicated region
      $region13: #{tpu_custom_call.1} parent=5 // pred_check
        %p157 = pneg %p156
      $region14: #{tpu_custom_call.1} parent=5 // pred_check_branch
        %159 = sbr.rel (%p157) target = $region16
      $region15: #{tpu_custom_call.1} parent=5 // pred_region
        // Predicated region
        $region17: #{tpu_custom_call.1} parent=15 // pred_check
          %p160 = pneg %p53
        $region18: #{tpu_custom_call.1} parent=15 // pred_check_branch
          %162 = sbr.rel (%p160) target = $region20
        $region19: #{tpu_custom_call.1} parent=15 // pred_region
          %s163 = sand.u32 %s43, 1
          %s164 = scalar_lea.sflag [#allocation3], %s163
          %s165 = sand.u32 %s43, 1
          %s166 = smul.addr %s165, 16
          %s167 = scalar_lea.vmem [#allocation2], %s166
          %s168 = smul.u32 2, %s27
          %s170 = ssub.s32 256, 256
          %171 = vsyncadd %s164, %s170
          %s172 = smul.addr %s26, 2
          %s173 = sadd.s32 %s168, %s172
          %s174 = smul.addr %s173, 128
          %s175 = scalar_lea.hbm %s0, %s174
          %s177 = sshll.u32 %s167, 4
          %s178 = int_to_ptr.vmem [resolvable:$true] %s177
          %180 = dma.hbm_to_vmem [thread:$0]  %s175, 256, %s178, %s164
        $region20: #{tpu_custom_call.1} parent=15 // pred_fallthru
          _
        // Predicated region
        $region21: #{tpu_custom_call.1} parent=15 // pred_check
          %p181 = pneg %p81
        $region22: #{tpu_custom_call.1} parent=15 // pred_check_branch
          %183 = sbr.rel (%p181) target = $region24
        $region23: #{tpu_custom_call.1} parent=15 // pred_region
          %s184 = sand.u32 %s71, 1
          %s185 = scalar_lea.sflag [#allocation6], %s184
          %s186 = sand.u32 %s71, 1
          %s187 = smul.addr %s186, 16
          %s188 = scalar_lea.vmem [#allocation5], %s187
          %s189 = smul.u32 2, %s27
          %s191 = ssub.s32 256, 256
          %192 = vsyncadd %s185, %s191
          %s193 = smul.addr %s26, 2
          %s194 = sadd.s32 %s189, %s193
          %s195 = smul.addr %s194, 128
          %s196 = scalar_lea.hbm %s1, %s195
          %s198 = sshll.u32 %s188, 4
          %s199 = int_to_ptr.vmem [resolvable:$true] %s198
          %201 = dma.hbm_to_vmem [thread:$0]  %s196, 256, %s199, %s185
        $region24: #{tpu_custom_call.1} parent=15 // pred_fallthru
          _
      $region16: #{tpu_custom_call.1} parent=5 // pred_fallthru
        _
      %p202 = scmp.le.s32.totalorder 1, %s19
      %p203 = scmp.lt.s32.totalorder %s19, 3
      %p204 = pnand %p202, %p203
      %p205 = pneg %p204
      // Predicated region
      $region25: #{tpu_custom_call.1} parent=5 // pred_check
        _
      $region26: #{tpu_custom_call.1} parent=5 // pred_check_branch
        %207 = sbr.rel (%p204) target = $region28
      $region27: #{tpu_custom_call.1} parent=5 // pred_region
        %s208 = ssub.s32 %s19, 1
        %s209 = sand.u32 %s46, 1
        %s210 = scalar_lea.sflag [#allocation3], %s209
        %s211 = sand.u32 %s46, 1
        %s212 = smul.addr %s211, 16
        %s213 = scalar_lea.vmem [#allocation2], %s212
        // Predicated region
        $region29: #{tpu_custom_call.1} parent=27 // pred_check
          %p214 = pneg %p59
        $region30: #{tpu_custom_call.1} parent=27 // pred_check_branch
          %216 = sbr.rel (%p214) target = $region32
        $region31: #{tpu_custom_call.1} parent=27 // pred_region
          %217 = dma.done %s210, 256
        $region32: #{tpu_custom_call.1} parent=27 // pred_fallthru
          _
        %s218 = sand.u32 %s74, 1
        %s219 = scalar_lea.sflag [#allocation6], %s218
        %s220 = sand.u32 %s74, 1
        %s221 = smul.addr %s220, 16
        %s222 = scalar_lea.vmem [#allocation5], %s221
        // Predicated region
        $region33: #{tpu_custom_call.1} parent=27 // pred_check
          %p223 = pneg %p87
        $region34: #{tpu_custom_call.1} parent=27 // pred_check_branch
          %225 = sbr.rel (%p223) target = $region36
        $region35: #{tpu_custom_call.1} parent=27 // pred_region
          %226 = dma.done %s219, 256
        $region36: #{tpu_custom_call.1} parent=27 // pred_fallthru
          _
        %s227 = sand.u32 %s46, 1
        %s228 = scalar_lea.sflag [#allocation3], %s227
        %s229 = sand.u32 %s46, 1
        %s230 = smul.addr %s229, 16
        %s231 = scalar_lea.vmem [#allocation2], %s230
        %p232 = pneg %p59
        %p233 = pneg %p56
        %s234 = sand.u32 %s74, 1
        %s235 = scalar_lea.sflag [#allocation6], %s234
        %s236 = sand.u32 %s74, 1
        %s237 = smul.addr %s236, 16
        %s238 = scalar_lea.vmem [#allocation5], %s237
        %p239 = pneg %p87
        %p240 = pneg %p84
        %p241 = pneg %p115
        %p242 = pneg %p112
        %s243 = sand.u32 %s102, 1
        %s244 = scalar_lea.sflag [#allocation4], %s243
        %s245 = sand.u32 %s102, 1
        %s246 = smul.addr %s245, 2
        %s247 = scalar_lea.vmem [#allocation7], %s246
        %p248 = pneg %p141
        %p249 = pneg %p138
        %p250 = scmp.lt.s32.totalorder %s28, 1
        %s251 = scalar_select %p250, %s28, 1
        %s252 = scalar_lea.vmem %s3, %s251
        %s253 = smul.u32 2, %s29
        %s254 = smul.u32 2, %s29
        %s255 = smul.u32 2, %s29
        %p256 = scmp.lt.s32.totalorder %s28, 1
        %s257 = scalar_select %p256, %s28, 1
        %s258 = scalar_lea.vmem %s3, %s257
        %p259 = scmp.eq.s32.totalorder %s29, 0
        // Predicated region
        $region37: #{tpu_custom_call.1} parent=27 // pred_check
          %p260 = pneg %p259
        $region38: #{tpu_custom_call.1} parent=27 // pred_check_branch
          %262 = sbr.rel (%p260) target = $region40
        $region39: #{tpu_custom_call.1} parent=27 // pred_region
          %vm263 = vcmask 0
          %264 = vst.msk [vmem:[%s258] sm:$0x1] %vm263, -inf
        $region40: #{tpu_custom_call.1} parent=27 // pred_fallthru
          _
        %v265 = vld [vmem:[%s213] sm:$0xff]
        %v266 = vld [vmem:[%s213 + $0x8] sm:$0xff]
        %v267 = vld [vmem:[%s222] sm:$0xff]
        %v268 = vld [vmem:[%s222 + $0x8] sm:$0xff]
        %v269 = vmul.f32 %v265, %v267
        %v270 = vmul.f32 %v266, %v268
        %v271 = vrot.slane %v269, 4
        %v272 = vadd.f32 %v269, %v271
        %v273 = vrot.slane %v272, 2
        %v274 = vadd.f32 %v272, %v273
        %v275 = vrot.slane %v274, 1
        %v276 = vadd.f32 %v274, %v275
        %v277 = vrot.slane %v270, 4
        %v278 = vadd.f32 %v270, %v277
        %v279 = vrot.slane %v278, 2
        %v280 = vadd.f32 %v278, %v279
        %v281 = vrot.slane %v280, 1
        %v282 = vadd.f32 %v280, %v281
        %v283 = vmul.f32 %v265, %v265
        %v284 = vmul.f32 %v266, %v266
        %v285 = vrot.slane %v283, 4
        %v286 = vadd.f32 %v283, %v285
        %v287 = vrot.slane %v286, 2
        %v288 = vadd.f32 %v286, %v287
        %v289 = vrot.slane %v288, 1
        %v290 = vadd.f32 %v288, %v289
        %v291 = vrot.slane %v284, 4
        %v292 = vadd.f32 %v284, %v291
        %v293 = vrot.slane %v292, 2
        %v294 = vadd.f32 %v292, %v293
        %v295 = vrot.slane %v294, 1
        %v296 = vadd.f32 %v294, %v295
        %v297 = vmul.f32 %v267, %v267
        %v298 = vmul.f32 %v268, %v268
        %v299 = vrot.slane %v297, 4
        %v300 = vadd.f32 %v297, %v299
        %v301 = vrot.slane %v300, 2
        %v302 = vadd.f32 %v300, %v301
        %v303 = vrot.slane %v302, 1
        %v304 = vadd.f32 %v302, %v303
        %v305 = vrot.slane %v298, 4
        %v306 = vadd.f32 %v298, %v305
        %v307 = vrot.slane %v306, 2
        %v308 = vadd.f32 %v306, %v307
        %v309 = vrot.slane %v308, 1
        %v310 = vadd.f32 %v308, %v309
        %v311 = vmax.f32 %v290, 1e-16
        %v312 = vmax.f32 %v296, 1e-16
        %v313 = vrsqrt.pop %v311
        %v314 = vrsqrt.pop %v312
        %v315 = vmul.f32 %v276, %v313
        %v316 = vmul.f32 %v282, %v314
        %v317 = vmax.f32 %v304, 1e-16
        %v318 = vmax.f32 %v310, 1e-16
        %v319 = vrsqrt.pop %v317
        %v320 = vrsqrt.pop %v318
        %v321 = vmul.f32 %v315, %v319
        %v322 = vmul.f32 %v316, %v320
        %v325 = vcombine.low %v321, %v322
        %v327 = vunpack.c.l.s4 1966171168
        %v328 = vunpack.c.0.s8 %v327
        %v329 = vlaneseq
        %v330 = vshrl.u32 %v329, 7
        %v331 = vsub.s32 %v328, %v330
        %v332 = vrot.slane %v325, %v331
        %v334 = vunpack.c.l.s4 1966171168
        %v335 = vunpack.c.0.s8 %v334
        %v336 = vlaneseq
        %v337 = vshrl.u32 %v336, 7
        %v338 = vsub.s32 %v335, %v337
        %v339 = vrot.slane %v332, %v338
        %v341 = vlaneseq
        %vm342 = vcmp.ge.s32.totalorder %v341, 0
        %vm343 = vcmp.lt.s32.totalorder %v341, 256
        %vm344 = vmand %vm342, %vm343
        %345 = vst.msk [vmem:[%s247] sm:$0x3] %vm344, %v339
        %v346 = vmax.f32 %v321, %v322
        %347 = vmax.xlane.f32.xlu0 %v346
        %v348 = vpop.xlane.xlu0 %347
        %v349 = vld [vmem:[%s258] sm:$0x1]
        %v350 = vmax.f32 %v349, %v348
        %vm351 = vcmask 0
        %352 = vst.msk [vmem:[%s258] sm:$0x1] %vm351, %v350
        %s353 = sand.u32 %s102, 1
        %s354 = scalar_lea.sflag [#allocation4], %s353
        %s355 = sand.u32 %s102, 1
        %s356 = smul.addr %s355, 2
        %s357 = scalar_lea.vmem [#allocation7], %s356
        %p358 = scmp.lt.s32.totalorder %s28, 1
        %s359 = scalar_select %p358, %s28, 1
        %s360 = scalar_lea.vmem %s3, %s359
        // Predicated region
        $region41: #{tpu_custom_call.1} parent=27 // pred_check
          %p361 = pneg %p112
        $region42: #{tpu_custom_call.1} parent=27 // pred_check_branch
          %363 = sbr.rel (%p361) target = $region44
        $region43: #{tpu_custom_call.1} parent=27 // pred_region
          %s364 = smul.u32 2, %s29
          %s366 = ssub.s32 32, 32
          %367 = vsyncadd %s354, %s366
          %s368 = smul.addr %s28, 2
          %s369 = sadd.s32 %s364, %s368
          %s370 = smul.addr %s369, 16
          %s371 = scalar_lea.hbm %s2, %s370
          %s373 = sshll.u32 %s357, 4
          %s374 = int_to_ptr.vmem [resolvable:$true] %s373
          %376 = dma.vmem_to_hbm [thread:$0]  %s374, 32, %s371, %s354
        $region44: #{tpu_custom_call.1} parent=27 // pred_fallthru
          _
        // Predicated region
        $region45: #{tpu_custom_call.1} parent=27 // pred_check
          %p377 = pneg %p138
        $region46: #{tpu_custom_call.1} parent=27 // pred_check_branch
          %379 = sbr.rel (%p377) target = $region48
        $region47: #{tpu_custom_call.1} parent=27 // pred_region
          _
        $region48: #{tpu_custom_call.1} parent=27 // pred_fallthru
          _
      $region28: #{tpu_custom_call.1} parent=5 // pred_fallthru
        _
      %p380 = scmp.le.s32.totalorder 2, %s19
      // Predicated region
      $region49: #{tpu_custom_call.1} parent=5 // pred_check
        %p381 = pneg %p380
      $region50: #{tpu_custom_call.1} parent=5 // pred_check_branch
        %383 = sbr.rel (%p381) target = $region52
      $region51: #{tpu_custom_call.1} parent=5 // pred_region
        %s384 = ssub.s32 %s19, 2
        // Predicated region
        $region53: #{tpu_custom_call.1} parent=51 // pred_check
          %p385 = pneg %p118
        $region54: #{tpu_custom_call.1} parent=51 // pred_check_branch
          %387 = sbr.rel (%p385) target = $region56
        $region55: #{tpu_custom_call.1} parent=51 // pred_region
          %s388 = sand.u32 %s103, 1
          %s389 = scalar_lea.sflag [#allocation4], %s388
          %s390 = sand.u32 %s103, 1
          %s391 = smul.addr %s390, 2
          %s392 = scalar_lea.vmem [#allocation7], %s391
          %393 = dma.done %s389, 32
        $region56: #{tpu_custom_call.1} parent=51 // pred_fallthru
          _
        // Predicated region
        $region57: #{tpu_custom_call.1} parent=51 // pred_check
          %p394 = pneg %p144
        $region58: #{tpu_custom_call.1} parent=51 // pred_check_branch
          %396 = sbr.rel (%p394) target = $region60
        $region59: #{tpu_custom_call.1} parent=51 // pred_region
          %p397 = scmp.lt.s32.totalorder %s30, 1
          %s398 = scalar_select %p397, %s30, 1
          %s399 = scalar_lea.vmem %s3, %s398
        $region60: #{tpu_custom_call.1} parent=51 // pred_fallthru
          _
      $region52: #{tpu_custom_call.1} parent=5 // pred_fallthru
        _
    $region6: #{tpu_custom_call.1} parent=1 // loop_footer
      %s23 = sadd.s32 1, %s19
    $region7: #{tpu_custom_call.1} parent=1 // loop_footer_branch
      %18 = sbr.rel target = $region3
    $region8: #{tpu_custom_call.1} parent=1 // loop_exit
      _
    %400 = vsyncpa [#allocation3], 1
    %s401 = scalar_lea.sflag [#allocation3], 1
    %402 = vsyncpa %s401, 1
    %403 = vsyncpa [#allocation6], 1
    %s404 = scalar_lea.sflag [#allocation6], 1
    %405 = vsyncpa %s404, 1
    %406 = vsyncpa [#allocation4], 1
    %s407 = scalar_lea.sflag [#allocation4], 1
    %408 = vsyncpa %s407, 1

</llo_original>
